<compile_context>
chip_gen: v7x
topology: tpu7x:2x2x1
jax: 0.10.0
libtpu: 0.0.40
codegen_flags: <defaults>
</compile_context>

<pallas_src>
import jax
import jax.numpy as jnp
from jax.experimental import pallas as pl
from jax.experimental.pallas import tpu as pltpu

VDD = 1.2
A_H = 1.2   # chosen constant (undefined in reference snippet)
TAU = 1.0   # chosen constant (undefined in reference snippet)


# ----------------------------- tiling helpers ------------------------------

def _round_up(x, m):
    return (x + m - 1) // m * m


def _pick_tile(dim_pad, unit, cap):
    """Largest multiple of `unit` that divides dim_pad and is <= cap."""
    t = min(dim_pad, cap)
    while dim_pad % t:
        t -= unit
    return t


def _choose_tiles(b_pad, n_pad, k_pad):
    tm = _pick_tile(b_pad, 8, 256)      # batch tile (sublane axis)
    tn = _pick_tile(n_pad, 128, 256)    # output tile (lane axis)
    tk = _pick_tile(k_pad, 128, 512)    # reduction tile
    return tm, tn, tk


# ------------------------------- the kernel --------------------------------

def hidden_layer_kernel(x_ref, w_ref, out_ref, acc_ref):
    """x_ref:   (tm, tk)      f32  raw input tile
       w_ref:   (tk, 2*tn)    bf16 packed [pos_tile | neg_tile] quantized weight
       out_ref: (tm, tn)      f32  output tile
       acc_ref: (tm, 2*tn)    f32  VMEM accumulator (persists across k)."""
    k = pl.program_id(2)

    @pl.when(k == 0)
    def _():
        acc_ref[...] = jnp.zeros_like(acc_ref)

    # f_nmos: 2.5 * clamp(x - 0.2, min=0)^2   (f32 on the VPU)
    v = jnp.maximum(x_ref[...] - 0.2, 0.0)
    i_cur = (2.5 * v * v).astype(jnp.bfloat16)      # bf16 only at the dot

    # One fused MXU pass computes both the positive and negative current sums.
    acc_ref[...] += jnp.dot(i_cur, w_ref[...],
                            preferred_element_type=jnp.float32)

    @pl.when(k == pl.num_programs(2) - 1)
    def _():
        tn = out_ref.shape[-1]
        i_p = acc_ref[:, :tn]
        i_n = acc_ref[:, tn:]
        # g_pmos(i_p) - g_pmos(i_n) == A_H*(exp(-TAU*i_n) - exp(-TAU*i_p))
        # (clamp is a no-op: i_p, i_n >= 0 and A_H == VDD)
        out_ref[...] = A_H * (jnp.exp(-TAU * i_n) - jnp.exp(-TAU * i_p))


# ------------------------- one-time weight packing --------------------------

def prepare_hidden_layer_weights(w):
    """One-time parameter prep (do NOT call per forward pass):
       quantize -> split pos/neg -> transpose to (in, out) -> zero-pad to
       (K_pad, N_pad) -> interleave pos/neg at tn-tile granularity into a
       (K_pad, 2*N_pad) bf16 array (values in {0..8} are exact in bf16)."""
    out_feats, in_feats = w.shape
    k_pad = _round_up(in_feats, 128)
    n_pad = _round_up(out_feats, 128)
    _, tn, _ = _choose_tiles(8, n_pad, k_pad)   # tn depends only on n_pad

    wq = jnp.clip(jnp.round(jnp.asarray(w, jnp.float32)), -8.0, 7.0)
    pad = ((0, k_pad - in_feats), (0, n_pad - out_feats))
    w_pos = jnp.pad(jnp.maximum(wq, 0.0).T, pad)    # (K_pad, N_pad)
    w_neg = jnp.pad(jnp.maximum(-wq, 0.0).T, pad)   # (K_pad, N_pad)

    nt = n_pad // tn
    packed = jnp.concatenate(
        [w_pos.reshape(k_pad, nt, tn), w_neg.reshape(k_pad, nt, tn)],
        axis=-1,
    ).reshape(k_pad, 2 * n_pad)                     # [pos_0|neg_0|pos_1|neg_1|...]
    return packed.astype(jnp.bfloat16)


# --------------------------------- wrapper ----------------------------------

def hidden_layer(x, w_packed, out_feats):
    """x: (B, in_feats) f32, w_packed: output of prepare_hidden_layer_weights.
       Returns (B, out_feats) f32."""
    b, in_feats = x.shape
    k_pad, two_n_pad = w_packed.shape
    n_pad = two_n_pad // 2
    b_pad = _round_up(b, 8)
    tm, tn, tk = _choose_tiles(b_pad, n_pad, k_pad)

    x_pad = jnp.pad(jnp.asarray(x, jnp.float32),
                    ((0, b_pad - b), (0, k_pad - in_feats)))

    out = pl.pallas_call(
        hidden_layer_kernel,
        out_shape=jax.ShapeDtypeStruct((b_pad, n_pad), jnp.float32),
        grid_spec=pltpu.PrefetchScalarGridSpec(
            num_scalar_prefetch=0,
            grid=(b_pad // tm, n_pad // tn, k_pad // tk),
            in_specs=[
                pl.BlockSpec((tm, tk), lambda mi, j, k: (mi, k)),
                pl.BlockSpec((tk, 2 * tn), lambda mi, j, k: (k, j)),
            ],
            out_specs=pl.BlockSpec((tm, tn), lambda mi, j, k: (mi, j)),
            scratch_shapes=[pltpu.VMEM((tm, 2 * tn), jnp.float32)],
        ),
        compiler_params=pltpu.CompilerParams(
            dimension_semantics=("parallel", "parallel", "arbitrary")),
    )(x_pad, w_packed)

    return out[:b, :out_feats]


# -------------------------------- reference ---------------------------------

def hidden_layer_ref(x, w):
    """Pure-JAX (f32) reference mirroring the PyTorch forward."""
    wq = jnp.clip(jnp.round(w), -8.0, 7.0)                       # (out, in)
    i = 2.5 * jnp.maximum(x[:, None, :] - 0.2, 0.0) ** 2         # (B, 1, in)
    i_p = (jnp.maximum(wq, 0.0)[None] * i).sum(-1)               # (B, out)
    i_n = (jnp.maximum(-wq, 0.0)[None] * i).sum(-1)
    g = lambda c: jnp.clip(A_H * (1.0 - jnp.exp(-TAU * c)), 0.0, VDD)
    return g(i_p) - g(i_n)


if __name__ == "__main__":
    key = jax.random.PRNGKey(0)

    # --- Test 1: module default shapes (in=25, out=28, batch=2) ---
    k_x, k_w, key = jax.random.split(key, 3)
    in_feats, out_feats, batch = 25, 28, 2
    w = jax.random.uniform(k_w, (out_feats, in_feats),
                           minval=-4.0, maxval=4.0, dtype=jnp.float32)
    x = jax.random.uniform(k_x, (batch, in_feats),
                           minval=0.0, maxval=VDD, dtype=jnp.float32)

    w_packed = prepare_hidden_layer_weights(w)          # one-time prep
    out = jax.block_until_ready(hidden_layer(x, w_packed, out_feats))
    ref = hidden_layer_ref(x, w)
    assert out.shape == (batch, out_feats)
    assert jnp.allclose(out, ref, atol=1e-2, rtol=1e-2), (
        f"test1 max abs err {jnp.max(jnp.abs(out - ref))}")

    # --- Test 2: larger shapes exercising multi-step K reduction + N tiles ---
    k_x2, k_w2, key = jax.random.split(key, 3)
    in2, out2, batch2 = 600, 300, 16
    w2 = jax.random.uniform(k_w2, (out2, in2),
                            minval=-4.0, maxval=4.0, dtype=jnp.float32)
    x2 = jax.random.uniform(k_x2, (batch2, in2),
                            minval=0.0, maxval=VDD, dtype=jnp.float32)
    w2_packed = prepare_hidden_layer_weights(w2)
    out2_v = jax.block_until_ready(hidden_layer(x2, w2_packed, out2))
    ref2 = hidden_layer_ref(x2, w2)
    assert out2_v.shape == (batch2, out2)
    assert jnp.allclose(out2_v, ref2, atol=2e-2, rtol=2e-2), (
        f"test2 max abs err {jnp.max(jnp.abs(out2_v - ref2))}")

    print("KERNEL_OK")
</pallas_src>

<mosaic_0001>
module attributes {stable_mosaic.version = 11 : i64} {
  func.func @hidden_layer_kernel(%arg0: i32, %arg1: i32, %arg2: i32, %arg3: memref<8x128xf32, #tpu.memory_space<vmem>>, %arg4: memref<128x256xbf16, #tpu.memory_space<vmem>>, %arg5: memref<8x128xf32, #tpu.memory_space<vmem>>, %arg6: memref<8x256xf32, #tpu.memory_space<vmem>>) attributes {dimension_semantics = [#tpu.dimension_semantics<parallel>, #tpu.dimension_semantics<parallel>, #tpu.dimension_semantics<arbitrary>], iteration_bounds = array<i64: 1, 1, 1>, scalar_prefetch = 0 : i64, scratch_operands = 1 : i64, tpu.core_type = #tpu.core_type<tc>, window_params = [{transform_indices = @transform_0, window_bounds = array<i64: 8, 128>}, {transform_indices = @transform_1, window_bounds = array<i64: 128, 256>}, {transform_indices = @transform_2, window_bounds = array<i64: 8, 128>}]} {
    %c0_i32 = arith.constant 0 : i32
    %0 = arith.cmpi eq, %arg2, %c0_i32 : i32
    %1 = arith.extui %0 : i1 to i32
    %c0_i32_0 = arith.constant 0 : i32
    %2 = arith.cmpi ne, %1, %c0_i32_0 : i32
    scf.if %2 {
      %cst_13 = arith.constant 0.000000e+00 : f32
      %20 = vector.broadcast %cst_13 : f32 to vector<8x256xf32>
      %c0_14 = arith.constant 0 : index
      %c0_15 = arith.constant 0 : index
      %21 = vector.load %arg6[%c0_14, %c0_15] : memref<8x256xf32, #tpu.memory_space<vmem>>, vector<8x256xf32>
      tpu.vector_store %arg6[%c0_14, %c0_15], %20 {strides = array<i32>} : memref<8x256xf32, #tpu.memory_space<vmem>>, vector<8x256xf32>,
    } else {
    }
    %c0 = arith.constant 0 : index
    %c0_1 = arith.constant 0 : index
    %3 = vector.load %arg3[%c0, %c0_1] : memref<8x128xf32, #tpu.memory_space<vmem>>, vector<8x128xf32>
    %cst = arith.constant 2.000000e-01 : f32
    %4 = vector.broadcast %cst : f32 to vector<8x128xf32>
    %5 = arith.subf %3, %4 : vector<8x128xf32>
    %cst_2 = arith.constant 0.000000e+00 : f32
    %6 = vector.broadcast %cst_2 : f32 to vector<8x128xf32>
    %7 = arith.maximumf %5, %6 : vector<8x128xf32>
    %cst_3 = arith.constant 2.500000e+00 : f32
    %8 = vector.broadcast %cst_3 : f32 to vector<8x128xf32>
    %9 = arith.mulf %8, %7 : vector<8x128xf32>
    %10 = arith.mulf %9, %7 : vector<8x128xf32>
    %11 = arith.truncf %10 : vector<8x128xf32> to vector<8x128xbf16>
    %c0_4 = arith.constant 0 : index
    %c0_5 = arith.constant 0 : index
    %12 = vector.load %arg6[%c0_4, %c0_5] : memref<8x256xf32, #tpu.memory_space<vmem>>, vector<8x256xf32>
    %c0_6 = arith.constant 0 : index
    %c0_7 = arith.constant 0 : index
    %13 = vector.load %arg4[%c0_6, %c0_7] : memref<128x256xbf16, #tpu.memory_space<vmem>>, vector<128x256xbf16>
    %cst_8 = arith.constant dense<0.000000e+00> : vector<8x256xf32>
    %14 = tpu.matmul %11, %13, %cst_8 {dimension_numbers = #tpu.dot_dimension_numbers<[1], [0], [0], [1], [0, 0, 1, 1], [], []>} : vector<8x128xbf16>, vector<128x256xbf16>, vector<8x256xf32> -> vector<8x256xf32>
    %15 = arith.addf %12, %14 : vector<8x256xf32>
    %c0_9 = arith.constant 0 : index
    %c0_10 = arith.constant 0 : index
    %16 = vector.load %arg6[%c0_9, %c0_10] : memref<8x256xf32, #tpu.memory_space<vmem>>, vector<8x256xf32>
    tpu.vector_store %arg6[%c0_9, %c0_10], %15 {strides = array<i32>} : memref<8x256xf32, #tpu.memory_space<vmem>>, vector<8x256xf32>,
    %c0_i32_11 = arith.constant 0 : i32
    %17 = arith.cmpi eq, %arg2, %c0_i32_11 : i32
    %18 = arith.extui %17 : i1 to i32
    %c0_i32_12 = arith.constant 0 : i32
    %19 = arith.cmpi ne, %18, %c0_i32_12 : i32
    scf.if %19 {
      %c0_13 = arith.constant 0 : index
      %c0_14 = arith.constant 0 : index
      %20 = vector.load %arg6[%c0_13, %c0_14] : memref<8x256xf32, #tpu.memory_space<vmem>>, vector<8x128xf32>
      %c0_15 = arith.constant 0 : index
      %c128 = arith.constant 128 : index
      %21 = vector.load %arg6[%c0_15, %c128] : memref<8x256xf32, #tpu.memory_space<vmem>>, vector<8x128xf32>
      %cst_16 = arith.constant -1.000000e+00 : f32
      %22 = vector.broadcast %cst_16 : f32 to vector<8x128xf32>
      %23 = arith.mulf %22, %21 : vector<8x128xf32>
      %24 = math.exp %23 : vector<8x128xf32>
      %cst_17 = arith.constant -1.000000e+00 : f32
      %25 = vector.broadcast %cst_17 : f32 to vector<8x128xf32>
      %26 = arith.mulf %25, %20 : vector<8x128xf32>
      %27 = math.exp %26 : vector<8x128xf32>
      %28 = arith.subf %24, %27 : vector<8x128xf32>
      %cst_18 = arith.constant 1.200000e+00 : f32
      %29 = vector.broadcast %cst_18 : f32 to vector<8x128xf32>
      %30 = arith.mulf %29, %28 : vector<8x128xf32>
      %c0_19 = arith.constant 0 : index
      %c0_20 = arith.constant 0 : index
      %31 = vector.load %arg5[%c0_19, %c0_20] : memref<8x128xf32, #tpu.memory_space<vmem>>, vector<8x128xf32>
      tpu.vector_store %arg5[%c0_19, %c0_20], %30 {strides = array<i32>} : memref<8x128xf32, #tpu.memory_space<vmem>>, vector<8x128xf32>,
    } else {
    }
    return
  }
  func.func @transform_0(%arg0: i32, %arg1: i32, %arg2: i32) -> (i32, i32) {
    %c0_i32 = arith.constant 0 : i32
    return %arg0, %arg2 : i32, i32
  }
  func.func @transform_1(%arg0: i32, %arg1: i32, %arg2: i32) -> (i32, i32) {
    %c0_i32 = arith.constant 0 : i32
    return %arg2, %arg1 : i32, i32
  }
  func.func @transform_2(%arg0: i32, %arg1: i32, %arg2: i32) -> (i32, i32) {
    %c0_i32 = arith.constant 0 : i32
    return %arg0, %arg1 : i32, i32
  }
}

</mosaic_0001>

<llo_original>
// kernel: tpu_custom_call.1
$region0: #{tpu_custom_call.1}
  #allocation0 [shape = 'u32[]', space=smem, size = 0x4, offset = 0x4, fixed_abs, tag = 'smem constant byte address 0x4 - core index']
  #allocation1 [shape = 'u32[144,128]{1,0:T(1,128)}', space=vmem, size = 0x12000, scoped, tag = 'internal scratch']
  #allocation2 [shape = 'f32[8,256]{1,0:T(8,128)}', space=vmem, size = 0x2000, scoped, tag = 'scratch operand']
  %s0 = inlined_call_operand.hbm [shape: f32[8,128], index: 0, kind: input, shape index: {}]
  %s1 = inlined_call_operand.hbm [shape: bf16[128,256], index: 1, kind: input, shape index: {}]
  %s2 = inlined_call_operand.hbm [shape: f32[8,128], index: 2, kind: output, shape index: {}]
  %s3 = sld [smem:[#allocation0]]
  $region34: #{tpu_custom_call.1} parent=0
    _
  %s5 = ssub.s32 1, %s3
  %s6 = scalar_select 0, %s5, %s3
  $region1: #{tpu_custom_call.1} parent=0
    #allocation3 [shape = 'u8[4096]{0}', space=vmem, size = 0x1000, scoped, tag = 'input window, operand 0, single buffered']
    #allocation4 [shape = 's32[1]{0}', space=sflag, size = 0x4, scoped, tag = 'scoped memory for tpu_custom_call.1']
    #allocation5 [shape = 's32[1]{0}', space=sflag, size = 0x4, scoped, tag = 'scoped memory for tpu_custom_call.1']
    #allocation6 [shape = 'u8[65536]{0}', space=vmem, size = 0x10000, scoped, tag = 'input window, operand 1, single buffered']
    #allocation7 [shape = 's32[1]{0}', space=sflag, size = 0x4, scoped, tag = 'scoped memory for tpu_custom_call.1']
    #allocation8 [shape = 'u8[4096]{0}', space=vmem, size = 0x1000, scoped, tag = 'output window, operand 0, single buffered']
    %7 = vsyncpa [#allocation4], 0
    %8 = vsyncpa [#allocation7], 0
    %9 = vsyncpa [#allocation5], 0
    // Predicated region
    $region2: #{tpu_custom_call.1} parent=1 // pred_check
      _
    $region3: #{tpu_custom_call.1} parent=1 // pred_check_branch
      %11 = sbr.rel (0) target = $region5
    $region4: #{tpu_custom_call.1} parent=1 // pred_region
      %s13 = ssub.s32 128, 128
      %14 = vsyncadd [#allocation4], %s13
      %s16 = sshll.u32 [#allocation3], 4
      %s17 = int_to_ptr.vmem [resolvable:$true] %s16
      %19 = dma.hbm_to_vmem [thread:$0]  %s0, 128, %s17, [#allocation4]
    $region5: #{tpu_custom_call.1} parent=1 // pred_fallthru
      _
    // Predicated region
    $region6: #{tpu_custom_call.1} parent=1 // pred_check
      _
    $region7: #{tpu_custom_call.1} parent=1 // pred_check_branch
      %21 = sbr.rel (0) target = $region9
    $region8: #{tpu_custom_call.1} parent=1 // pred_region
      %s23 = ssub.s32 2048, 2048
      %24 = vsyncadd [#allocation7], %s23
      %s25 = sshll.u32 [#allocation6], 4
      %s26 = int_to_ptr.vmem [resolvable:$true] %s25
      %31 = dma.hbm_to_vmem [thread:$0]  %s1, 2048, %s26, [#allocation7], 128, 128, 8
    $region9: #{tpu_custom_call.1} parent=1 // pred_fallthru
      _
    // Predicated region
    $region10: #{tpu_custom_call.1} parent=1 // pred_check
      _
    $region11: #{tpu_custom_call.1} parent=1 // pred_check_branch
      %33 = sbr.rel (0) target = $region13
    $region12: #{tpu_custom_call.1} parent=1 // pred_region
      %34 = dma.done [#allocation4], 128
    $region13: #{tpu_custom_call.1} parent=1 // pred_fallthru
      _
    // Predicated region
    $region14: #{tpu_custom_call.1} parent=1 // pred_check
      _
    $region15: #{tpu_custom_call.1} parent=1 // pred_check_branch
      %36 = sbr.rel (0) target = $region17
    $region16: #{tpu_custom_call.1} parent=1 // pred_region
      %37 = dma.done [#allocation7], 2048
    $region17: #{tpu_custom_call.1} parent=1 // pred_fallthru
      _
    %p39 = scmp.eq.s32.totalorder 0, 0
    // Predicated region
    $region18: #{tpu_custom_call.1} parent=1 // pred_check
      %p40 = pneg %p39
    $region19: #{tpu_custom_call.1} parent=1 // pred_check_branch
      %42 = sbr.rel (%p40) target = $region21
    $region20: #{tpu_custom_call.1} parent=1 // pred_region
      %43 = vst [vmem:[#allocation2] sm:$0xff] 0.0
      %44 = vst [vmem:[#allocation2 + $0x8] sm:$0xff] 0.0
    $region21: #{tpu_custom_call.1} parent=1 // pred_fallthru
      _
    %v45 = vld [vmem:[#allocation3] sm:$0xff]
    %v46 = vsub.f32 %v45, 0.2
    %v47 = vmax.f32 %v46, 0.0
    %v48 = vmul.f32 %v47, 2.5
    %v49 = vmul.f32 %v48, %v47
    %v50 = vpack.c.bf16 %v49, %v49
    %v51 = vld [vmem:[#allocation2] sm:$0xff]
    %v52 = vld [vmem:[#allocation2 + $0x8] sm:$0xff]
    %v53 = vld [vmem:[#allocation6] sm:$0xff]
    %v54 = vld [vmem:[#allocation6 + $0x8] sm:$0xff]
    %v55 = vld [vmem:[#allocation6 + $0x10] sm:$0xff]
    %v56 = vld [vmem:[#allocation6 + $0x18] sm:$0xff]
    %v57 = vld [vmem:[#allocation6 + $0x20] sm:$0xff]
    %v58 = vld [vmem:[#allocation6 + $0x28] sm:$0xff]
    %v59 = vld [vmem:[#allocation6 + $0x30] sm:$0xff]
    %v60 = vld [vmem:[#allocation6 + $0x38] sm:$0xff]
    %v61 = vld [vmem:[#allocation6 + $0x40] sm:$0xff]
    %v62 = vld [vmem:[#allocation6 + $0x48] sm:$0xff]
    %v63 = vld [vmem:[#allocation6 + $0x50] sm:$0xff]
    %v64 = vld [vmem:[#allocation6 + $0x58] sm:$0xff]
    %v65 = vld [vmem:[#allocation6 + $0x60] sm:$0xff]
    %v66 = vld [vmem:[#allocation6 + $0x68] sm:$0xff]
    %v67 = vld [vmem:[#allocation6 + $0x70] sm:$0xff]
    %v68 = vld [vmem:[#allocation6 + $0x78] sm:$0xff]
    %v85 = vunpack.c.l.b16 %v53
    %v86 = vunpack.c.h.b16 %v53
    %v87 = vunpack.c.l.b16 %v54
    %v88 = vunpack.c.h.b16 %v54
    %v89 = vunpack.c.l.b16 %v55
    %v90 = vunpack.c.h.b16 %v55
    %v91 = vunpack.c.l.b16 %v56
    %v92 = vunpack.c.h.b16 %v56
    %v93 = vunpack.c.l.b16 %v57
    %v94 = vunpack.c.h.b16 %v57
    %v95 = vunpack.c.l.b16 %v58
    %v96 = vunpack.c.h.b16 %v58
    %v97 = vunpack.c.l.b16 %v59
    %v98 = vunpack.c.h.b16 %v59
    %v99 = vunpack.c.l.b16 %v60
    %v100 = vunpack.c.h.b16 %v60
    %v101 = vunpack.c.l.b16 %v61
    %v102 = vunpack.c.h.b16 %v61
    %v103 = vunpack.c.l.b16 %v62
    %v104 = vunpack.c.h.b16 %v62
    %v105 = vunpack.c.l.b16 %v63
    %v106 = vunpack.c.h.b16 %v63
    %v107 = vunpack.c.l.b16 %v64
    %v108 = vunpack.c.h.b16 %v64
    %v109 = vunpack.c.l.b16 %v65
    %v110 = vunpack.c.h.b16 %v65
    %v111 = vunpack.c.l.b16 %v66
    %v112 = vunpack.c.h.b16 %v66
    %v113 = vunpack.c.l.b16 %v67
    %v114 = vunpack.c.h.b16 %v67
    %v115 = vunpack.c.l.b16 %v68
    %v116 = vunpack.c.h.b16 %v68
    %v117 = vpack.c.b16 %v87, %v85
    %v118 = vpack.c.b16 %v88, %v86
    %v119 = vpack.c.b16 %v91, %v89
    %v120 = vpack.c.b16 %v92, %v90
    %v121 = vpack.c.b16 %v95, %v93
    %v122 = vpack.c.b16 %v96, %v94
    %v123 = vpack.c.b16 %v99, %v97
    %v124 = vpack.c.b16 %v100, %v98
    %v125 = vpack.c.b16 %v103, %v101
    %v126 = vpack.c.b16 %v104, %v102
    %v127 = vpack.c.b16 %v107, %v105
    %v128 = vpack.c.b16 %v108, %v106
    %v129 = vpack.c.b16 %v111, %v109
    %v130 = vpack.c.b16 %v112, %v110
    %v131 = vpack.c.b16 %v115, %v113
    %v132 = vpack.c.b16 %v116, %v114
    %149 = vmatprep.subr.bf16.mxu0 %v118
    %150 = vmatpush1.bf16.msra.mxu0 %v117
    %151 = vmatprep.subr.bf16.mxu0 %v120
    %152 = vmatpush1.bf16.msra.mxu0 %v119
    %153 = vmatprep.subr.bf16.mxu0 %v122
    %154 = vmatpush1.bf16.msra.mxu0 %v121
    %155 = vmatprep.subr.bf16.mxu0 %v124
    %156 = vmatpush1.bf16.msra.mxu0 %v123
    %157 = vmatprep.subr.bf16.mxu0 %v126
    %158 = vmatpush1.bf16.msra.mxu0 %v125
    %159 = vmatprep.subr.bf16.mxu0 %v128
    %160 = vmatpush1.bf16.msra.mxu0 %v127
    %161 = vmatprep.subr.bf16.mxu0 %v130
    %162 = vmatpush1.bf16.msra.mxu0 %v129
    %163 = vmatprep.subr.bf16.mxu0 %v132
    %164 = vmatpush1.bf16.msra.mxu0 %v131
    %165 = vmatprep.subr.bf16.mxu0 0
    %166 = vmatpush1.bf16.msra.mxu0 0
    %167 = vmatprep.subr.bf16.mxu0 0
    %168 = vmatpush1.bf16.msra.mxu0 0
    %169 = vmatprep.subr.bf16.mxu0 0
    %170 = vmatpush1.bf16.msra.mxu0 0
    %171 = vmatprep.subr.bf16.mxu0 0
    %172 = vmatpush1.bf16.msra.mxu0 0
    %173 = vmatprep.subr.bf16.mxu0 0
    %174 = vmatpush1.bf16.msra.mxu0 0
    %175 = vmatprep.subr.bf16.mxu0 0
    %176 = vmatpush1.bf16.msra.mxu0 0
    %177 = vmatprep.subr.bf16.mxu0 0
    %178 = vmatpush1.bf16.msra.mxu0 0
    %179 = vmatprep.subr.bf16.mxu0 0
    %180 = vmatpush1.bf16.msra.mxu0 0
    %181 = vmatprep.mubr.bf16.mxu0 0
    %182 = vmatmul.mubr.bf16.gmra.mrb[0].mxu0 %v50
    %v183 = vpop.f32.mrb[0].mxu0
    %v184 = vadd.f32 0.0, %v183
    %v185 = vpop.f32.mrb[0].mxu0
    %v186 = vadd.f32 0.0, %v185
    %v187 = vpop.f32.mrb[0].mxu0
    %v188 = vpop.f32.mrb[0].mxu0
    %189 = vdwg.mxu0
    %v190 = vadd.f32 %v51, %v184
    %v191 = vadd.f32 %v52, %v186
    %192 = vst [vmem:[#allocation2] sm:$0xff] %v190
    %193 = vst [vmem:[#allocation2 + $0x8] sm:$0xff] %v191
    // Predicated region
    $region22: #{tpu_custom_call.1} parent=1 // pred_check
      %p194 = pneg %p39
    $region23: #{tpu_custom_call.1} parent=1 // pred_check_branch
      %196 = sbr.rel (%p194) target = $region25
    $region24: #{tpu_custom_call.1} parent=1 // pred_region
      %v197 = vld [vmem:[#allocation2] sm:$0xff]
      %v198 = vld [vmem:[#allocation2 + $0x8] sm:$0xff]
      %v199 = vmul.f32 %v198, -1.0
      %v200 = vmul.f32 %v199, 1.442695
      %v201 = vpow.pop %v200
      %v202 = vmul.f32 %v197, -1.0
      %v203 = vmul.f32 %v202, 1.442695
      %v204 = vpow.pop %v203
      %v205 = vsub.f32 %v201, %v204
      %v206 = vmul.f32 %v205, 1.2
      %207 = vst [vmem:[#allocation8] sm:$0xff] %v206
    $region25: #{tpu_custom_call.1} parent=1 // pred_fallthru
      _
    // Predicated region
    $region26: #{tpu_custom_call.1} parent=1 // pred_check
      _
    $region27: #{tpu_custom_call.1} parent=1 // pred_check_branch
      %209 = sbr.rel (0) target = $region29
    $region28: #{tpu_custom_call.1} parent=1 // pred_region
      %s211 = ssub.s32 128, 128
      %212 = vsyncadd [#allocation5], %s211
      %s214 = sshll.u32 [#allocation8], 4
      %s215 = int_to_ptr.vmem [resolvable:$true] %s214
      %217 = dma.vmem_to_hbm [thread:$0]  %s215, 128, %s2, [#allocation5]
    $region29: #{tpu_custom_call.1} parent=1 // pred_fallthru
      _
    // Predicated region
    $region30: #{tpu_custom_call.1} parent=1 // pred_check
      _
    $region31: #{tpu_custom_call.1} parent=1 // pred_check_branch
      %219 = sbr.rel (0) target = $region33
    $region32: #{tpu_custom_call.1} parent=1 // pred_region
      %220 = dma.done [#allocation5], 128
    $region33: #{tpu_custom_call.1} parent=1 // pred_fallthru
      _
    %221 = vsyncpa [#allocation4], 1
    %222 = vsyncpa [#allocation7], 1
    %223 = vsyncpa [#allocation5], 1

</llo_original>
